<compile_context>
chip_gen: v5e
topology: v5e:2x2
jax: 0.10.0
libtpu: 0.0.40
codegen_flags: <defaults>
</compile_context>

<pallas_src>
import functools

import jax
import jax.numpy as jnp
import numpy as np
from jax.experimental import pallas as pl
from jax.experimental.pallas import tpu as pltpu


def _dynamic_loss_kernel(split_ref, logits_ref, targets_ref,
                         sum_ref, cnt_ref, acc_sum, acc_cnt,
                         *, gamma, ignore_index, hw, tile,
                         use_gamma, need_tail_mask):
    n = pl.program_id(0)      # image index
    i = pl.program_id(1)      # pixel-tile index within the image

    @pl.when(i == 0)
    def _():
        acc_sum[...] = jnp.zeros_like(acc_sum)
        acc_cnt[...] = jnp.zeros_like(acc_cnt)

    logits = logits_ref[...].astype(jnp.float32)   # (C, tile)
    tgt = targets_ref[...]                         # (1, tile) int32

    valid = tgt != ignore_index                    # (1, tile) bool
    if need_tail_mask:
        # mask pixels past H*W in the (possibly overrunning) last tile
        pix = i * tile + jax.lax.broadcasted_iota(jnp.int32, (1, tile), 1)
        valid = jnp.logical_and(valid, pix < hw)

    # numerically-stable log-sum-exp over the class (sublane) axis
    m = jnp.max(logits, axis=0, keepdims=True)                             # (1, tile)
    lse = m + jnp.log(jnp.sum(jnp.exp(logits - m), axis=0, keepdims=True))

    # gather logits[target] via one-hot select + sublane reduce
    safe_tgt = jnp.where(valid, tgt, 0)
    class_ids = jax.lax.broadcasted_iota(jnp.int32, logits.shape, 0)       # (C, tile)
    onehot = class_ids == safe_tgt
    logit_t = jnp.sum(jnp.where(onehot, logits, 0.0), axis=0, keepdims=True)

    ce = lse - logit_t                             # raw cross-entropy (unmasked)

    if use_gamma:
        # images [0, split_index) get prob(target)**gamma == exp(-gamma * ce)
        # weighting; the EUP exp is skipped entirely for the other images.
        @pl.when(n < split_ref[0])
        def _():
            gamma_w = jnp.exp(ce * jnp.float32(-gamma))
            acc_sum[...] += jnp.where(valid, ce * gamma_w, 0.0)

        @pl.when(n >= split_ref[0])
        def _():
            acc_sum[...] += jnp.where(valid, ce, 0.0)
    else:
        acc_sum[...] += jnp.where(valid, ce, 0.0)

    acc_cnt[...] += valid.astype(jnp.float32)

    @pl.when(i == pl.num_programs(1) - 1)
    def _():
        sum_ref[...] = jnp.sum(acc_sum[...], keepdims=True)   # (1, 1)
        cnt_ref[...] = jnp.sum(acc_cnt[...], keepdims=True)   # (1, 1)


def _choose_tile(hw, c, itemsize, cap=2048, logits_vmem_budget=8 * 1024 * 1024):
    """Pick a lane tile: big enough for HBM roofline (>=512 lanes when possible),
    but keep the 2x double-buffered logits blocks well inside the smallest
    default scoped VMEM (v5e ~16 MiB)."""
    if hw < 128:
        return hw                                   # block == full dim, no tail
    by_vmem = logits_vmem_budget // max(1, 2 * c * itemsize)
    cap = max(128, min(cap, (by_vmem // 128) * 128))
    return min(cap, (hw // 128) * 128)


def dynamic_loss(inputs, targets, split_index=None, gamma=0.0,
                 ignore_index=-100, tile=None):
    """inputs: (N, C, H, W) float logits (NCHW); targets: (N, H, W) int labels."""
    N, C, H, W = inputs.shape
    HW = H * W

    logits = inputs.reshape(N, C, HW)                    # free reshape, no transpose
    tgt = targets.reshape(N, 1, HW).astype(jnp.int32)    # free reshape

    use_gamma = (split_index is not None) and (gamma != 0)
    split_arr = jnp.full((1,), int(split_index) if use_gamma else 0, dtype=jnp.int32)

    if tile is None:
        tile = _choose_tile(HW, C, inputs.dtype.itemsize)
    num_tiles = pl.cdiv(HW, tile)
    need_tail_mask = (HW % tile) != 0

    kernel = functools.partial(_dynamic_loss_kernel,
                               gamma=float(gamma),
                               ignore_index=int(ignore_index),
                               hw=HW, tile=tile,
                               use_gamma=use_gamma,
                               need_tail_mask=need_tail_mask)

    sum_part, cnt_part = pl.pallas_call(
        kernel,
        out_shape=(jax.ShapeDtypeStruct((N, 1, 1), jnp.float32),
                   jax.ShapeDtypeStruct((N, 1, 1), jnp.float32)),
        grid_spec=pltpu.PrefetchScalarGridSpec(
            num_scalar_prefetch=1,
            grid=(N, num_tiles),
            in_specs=[pl.BlockSpec((None, C, tile), lambda n, i, s: (n, 0, i)),
                      pl.BlockSpec((None, 1, tile), lambda n, i, s: (n, 0, i))],
            out_specs=(pl.BlockSpec((None, 1, 1), lambda n, i, s: (n, 0, 0)),
                       pl.BlockSpec((None, 1, 1), lambda n, i, s: (n, 0, 0))),
            scratch_shapes=[pltpu.VMEM((1, tile), jnp.float32),
                            pltpu.VMEM((1, tile), jnp.float32)]),
        compiler_params=pltpu.CompilerParams(
            dimension_semantics=("parallel", "arbitrary")),
    )(split_arr, logits, tgt)

    loss_sum = jnp.sum(sum_part)
    valid_cnt = jnp.sum(cnt_part)
    # Matches F.cross_entropy(reduction='mean'): NaN if every pixel is ignored.
    total_loss = loss_sum / valid_cnt
    statistics = {"dl": total_loss}      # device scalar; no host sync here
    return total_loss, statistics


def _reference(inputs, targets, split_index, gamma, ignore_index):
    N, C, H, W = inputs.shape
    logits = np.transpose(np.asarray(inputs, np.float64), (0, 2, 3, 1)).reshape(-1, C)
    tgt = np.asarray(targets).reshape(-1)
    valid = tgt != ignore_index
    safe = np.where(valid, tgt, 0)
    m = logits.max(axis=1)
    lse = m + np.log(np.exp(logits - m[:, None]).sum(axis=1))
    logit_t = logits[np.arange(logits.shape[0]), safe]
    ce = np.where(valid, lse - logit_t, 0.0)
    if split_index is None or gamma == 0:
        w = np.ones_like(ce)
    else:
        prob = np.exp(logit_t - lse)
        batch = np.repeat(np.arange(N), H * W)
        w = np.where(batch < split_index, prob ** gamma, 1.0)
    return (ce * w).sum() / valid.sum()


if __name__ == "__main__":
    key = jax.random.PRNGKey(0)
    k1, k2, k3, k4, k5, k6 = jax.random.split(key, 6)

    N, C, H, W = 2, 4, 16, 16
    ignore_index = -100
    gamma = 2.0
    split_index = 1   # images [0, split_index) get prob**gamma weighting

    inputs = jax.random.normal(k1, (N, C, H, W), dtype=jnp.float32)
    targets = jax.random.randint(k2, (N, H, W), 0, C, dtype=jnp.int32)
    ignore_mask = jax.random.uniform(k3, (N, H, W)) < 0.1
    targets = jnp.where(ignore_mask, ignore_index, targets)

    loss, stats = dynamic_loss(inputs, targets, split_index=split_index,
                               gamma=gamma, ignore_index=ignore_index)
    loss = jax.block_until_ready(loss)
    ref = _reference(inputs, targets, split_index, gamma, ignore_index)
    assert np.allclose(float(loss), ref, rtol=1e-4, atol=1e-5), (float(loss), ref)

    # simple branch (split_index=None -> unit weights, gamma path skipped statically)
    loss2, _ = dynamic_loss(inputs, targets, split_index=None,
                            gamma=gamma, ignore_index=ignore_index)
    loss2 = jax.block_until_ready(loss2)
    ref2 = _reference(inputs, targets, None, gamma, ignore_index)
    assert np.allclose(float(loss2), ref2, rtol=1e-4, atol=1e-5), (float(loss2), ref2)

    # non-multiple-of-128 spatial size exercises the in-kernel tail mask
    H2 = W2 = 12
    inputs3 = jax.random.normal(k4, (N, C, H2, W2), dtype=jnp.float32)
    targets3 = jax.random.randint(k5, (N, H2, W2), 0, C, dtype=jnp.int32)
    targets3 = jnp.where(jax.random.uniform(k6, (N, H2, W2)) < 0.1,
                         ignore_index, targets3)
    loss3, _ = dynamic_loss(inputs3, targets3, split_index=split_index,
                            gamma=gamma, ignore_index=ignore_index)
    loss3 = jax.block_until_ready(loss3)
    ref3 = _reference(inputs3, targets3, split_index, gamma, ignore_index)
    assert np.allclose(float(loss3), ref3, rtol=1e-4, atol=1e-5), (float(loss3), ref3)

    print("KERNEL_OK")
</pallas_src>

<mosaic_0001>
module attributes {stable_mosaic.version = 11 : i64} {
  func.func @_dynamic_loss_kernel(%arg0: i32, %arg1: i32, %arg2: memref<1xi32, #tpu.memory_space<smem>>, %arg3: memref<1x4x256xf32, #tpu.memory_space<vmem>>, %arg4: memref<1x1x256xi32, #tpu.memory_space<vmem>>, %arg5: memref<1x1x1xf32, #tpu.memory_space<vmem>>, %arg6: memref<1x1x1xf32, #tpu.memory_space<vmem>>, %arg7: memref<1x256xf32, #tpu.memory_space<vmem>>, %arg8: memref<1x256xf32, #tpu.memory_space<vmem>>) attributes {dimension_semantics = [#tpu.dimension_semantics<parallel>, #tpu.dimension_semantics<arbitrary>], iteration_bounds = array<i64: 2, 1>, scalar_prefetch = 1 : i64, scratch_operands = 2 : i64, tpu.core_type = #tpu.core_type<tc>, window_params = [{transform_indices = @transform_0, window_bounds = array<i64: 1, 4, 256>}, {transform_indices = @transform_1, window_bounds = array<i64: 1, 1, 256>}, {transform_indices = @transform_2, window_bounds = array<i64: 1, 1, 1>}, {transform_indices = @transform_3, window_bounds = array<i64: 1, 1, 1>}]} {
    %c0_i32 = arith.constant 0 : i32
    %0 = arith.cmpi eq, %arg1, %c0_i32 : i32
    %1 = arith.extui %0 : i1 to i32
    %c0_i32_0 = arith.constant 0 : i32
    %2 = arith.cmpi ne, %1, %c0_i32_0 : i32
    scf.if %2 {
      %cst_20 = arith.constant 0.000000e+00 : f32
      %44 = vector.broadcast %cst_20 : f32 to vector<1x256xf32>
      %c0_21 = arith.constant 0 : index
      %c0_22 = arith.constant 0 : index
      %45 = vector.load %arg7[%c0_21, %c0_22] : memref<1x256xf32, #tpu.memory_space<vmem>>, vector<1x256xf32>
      tpu.vector_store %arg7[%c0_21, %c0_22], %44 {strides = array<i32>} : memref<1x256xf32, #tpu.memory_space<vmem>>, vector<1x256xf32>,
      %cst_23 = arith.constant 0.000000e+00 : f32
      %46 = vector.broadcast %cst_23 : f32 to vector<1x256xf32>
      %c0_24 = arith.constant 0 : index
      %c0_25 = arith.constant 0 : index
      %47 = vector.load %arg8[%c0_24, %c0_25] : memref<1x256xf32, #tpu.memory_space<vmem>>, vector<1x256xf32>
      tpu.vector_store %arg8[%c0_24, %c0_25], %46 {strides = array<i32>} : memref<1x256xf32, #tpu.memory_space<vmem>>, vector<1x256xf32>,
    } else {
    }
    %c0 = arith.constant 0 : index
    %c0_1 = arith.constant 0 : index
    %c0_2 = arith.constant 0 : index
    %3 = vector.load %arg3[%c0, %c0_1, %c0_2] : memref<1x4x256xf32, #tpu.memory_space<vmem>>, vector<1x4x256xf32>
    %4 = vector.shape_cast %3 : vector<1x4x256xf32> to vector<4x256xf32>
    %c0_3 = arith.constant 0 : index
    %c0_4 = arith.constant 0 : index
    %c0_5 = arith.constant 0 : index
    %5 = vector.load %arg4[%c0_3, %c0_4, %c0_5] : memref<1x1x256xi32, #tpu.memory_space<vmem>>, vector<1x1x256xi32>
    %6 = vector.shape_cast %5 : vector<1x1x256xi32> to vector<1x256xi32>
    %c-100_i32 = arith.constant -100 : i32
    %7 = vector.broadcast %c-100_i32 : i32 to vector<1x256xi32>
    %8 = arith.cmpi ne, %6, %7 : vector<1x256xi32>
    %cst = arith.constant dense<0xFF800000> : vector<256xf32>
    %9 = vector.multi_reduction <maximumf>, %4, %cst [0] : vector<4x256xf32> to vector<256xf32>
    %10 = vector.shape_cast %9 : vector<256xf32> to vector<1x256xf32>
    %11 = vector.broadcast %10 : vector<1x256xf32> to vector<4x256xf32>
    %12 = arith.subf %4, %11 : vector<4x256xf32>
    %13 = math.exp %12 : vector<4x256xf32>
    %cst_6 = arith.constant dense<0.000000e+00> : vector<256xf32>
    %14 = vector.multi_reduction <add>, %13, %cst_6 [0] : vector<4x256xf32> to vector<256xf32>
    %15 = vector.shape_cast %14 : vector<256xf32> to vector<1x256xf32>
    %16 = math.log %15 : vector<1x256xf32>
    %17 = arith.addf %10, %16 : vector<1x256xf32>
    %c0_i32_7 = arith.constant 0 : i32
    %18 = vector.broadcast %c0_i32_7 : i32 to vector<1x256xi32>
    %19 = arith.select %8, %6, %18 : vector<1x256xi1>, vector<1x256xi32>
    %20 = tpu.iota {dimensions = array<i32: 0>} : vector<4x256xi32>
    %21 = vector.broadcast %19 : vector<1x256xi32> to vector<4x256xi32>
    %22 = arith.cmpi eq, %20, %21 : vector<4x256xi32>
    %cst_8 = arith.constant 0.000000e+00 : f32
    %23 = vector.broadcast %cst_8 : f32 to vector<4x256xf32>
    %24 = arith.select %22, %4, %23 : vector<4x256xi1>, vector<4x256xf32>
    %cst_9 = arith.constant dense<0.000000e+00> : vector<256xf32>
    %25 = vector.multi_reduction <add>, %24, %cst_9 [0] : vector<4x256xf32> to vector<256xf32>
    %26 = vector.shape_cast %25 : vector<256xf32> to vector<1x256xf32>
    %27 = arith.subf %17, %26 : vector<1x256xf32>
    %c0_10 = arith.constant 0 : index
    %28 = memref.load %arg2[%c0_10] : memref<1xi32, #tpu.memory_space<smem>>
    %29 = arith.cmpi slt, %arg0, %28 : i32
    %30 = arith.extui %29 : i1 to i32
    %c0_i32_11 = arith.constant 0 : i32
    %31 = arith.cmpi ne, %30, %c0_i32_11 : i32
    scf.if %31 {
      %cst_20 = arith.constant -2.000000e+00 : f32
      %44 = vector.broadcast %cst_20 : f32 to vector<1x256xf32>
      %45 = arith.mulf %27, %44 : vector<1x256xf32>
      %46 = math.exp %45 : vector<1x256xf32>
      %c0_21 = arith.constant 0 : index
      %c0_22 = arith.constant 0 : index
      %47 = vector.load %arg7[%c0_21, %c0_22] : memref<1x256xf32, #tpu.memory_space<vmem>>, vector<1x256xf32>
      %48 = arith.mulf %27, %46 : vector<1x256xf32>
      %cst_23 = arith.constant 0.000000e+00 : f32
      %49 = vector.broadcast %cst_23 : f32 to vector<1x256xf32>
      %50 = arith.select %8, %48, %49 : vector<1x256xi1>, vector<1x256xf32>
      %51 = arith.addf %47, %50 : vector<1x256xf32>
      %c0_24 = arith.constant 0 : index
      %c0_25 = arith.constant 0 : index
      %52 = vector.load %arg7[%c0_24, %c0_25] : memref<1x256xf32, #tpu.memory_space<vmem>>, vector<1x256xf32>
      tpu.vector_store %arg7[%c0_24, %c0_25], %51 {strides = array<i32>} : memref<1x256xf32, #tpu.memory_space<vmem>>, vector<1x256xf32>,
    } else {
    }
    %c0_12 = arith.constant 0 : index
    %32 = memref.load %arg2[%c0_12] : memref<1xi32, #tpu.memory_space<smem>>
    %33 = arith.cmpi sge, %arg0, %32 : i32
    %34 = arith.extui %33 : i1 to i32
    %c0_i32_13 = arith.constant 0 : i32
    %35 = arith.cmpi ne, %34, %c0_i32_13 : i32
    scf.if %35 {
      %c0_20 = arith.constant 0 : index
      %c0_21 = arith.constant 0 : index
      %44 = vector.load %arg7[%c0_20, %c0_21] : memref<1x256xf32, #tpu.memory_space<vmem>>, vector<1x256xf32>
      %cst_22 = arith.constant 0.000000e+00 : f32
      %45 = vector.broadcast %cst_22 : f32 to vector<1x256xf32>
      %46 = arith.select %8, %27, %45 : vector<1x256xi1>, vector<1x256xf32>
      %47 = arith.addf %44, %46 : vector<1x256xf32>
      %c0_23 = arith.constant 0 : index
      %c0_24 = arith.constant 0 : index
      %48 = vector.load %arg7[%c0_23, %c0_24] : memref<1x256xf32, #tpu.memory_space<vmem>>, vector<1x256xf32>
      tpu.vector_store %arg7[%c0_23, %c0_24], %47 {strides = array<i32>} : memref<1x256xf32, #tpu.memory_space<vmem>>, vector<1x256xf32>,
    } else {
    }
    %c0_14 = arith.constant 0 : index
    %c0_15 = arith.constant 0 : index
    %36 = vector.load %arg8[%c0_14, %c0_15] : memref<1x256xf32, #tpu.memory_space<vmem>>, vector<1x256xf32>
    %37 = arith.extui %8 : vector<1x256xi1> to vector<1x256xi32>
    %38 = arith.sitofp %37 : vector<1x256xi32> to vector<1x256xf32>
    %39 = arith.addf %36, %38 : vector<1x256xf32>
    %c0_16 = arith.constant 0 : index
    %c0_17 = arith.constant 0 : index
    %40 = vector.load %arg8[%c0_16, %c0_17] : memref<1x256xf32, #tpu.memory_space<vmem>>, vector<1x256xf32>
    tpu.vector_store %arg8[%c0_16, %c0_17], %39 {strides = array<i32>} : memref<1x256xf32, #tpu.memory_space<vmem>>, vector<1x256xf32>,
    %c0_i32_18 = arith.constant 0 : i32
    %41 = arith.cmpi eq, %arg1, %c0_i32_18 : i32
    %42 = arith.extui %41 : i1 to i32
    %c0_i32_19 = arith.constant 0 : i32
    %43 = arith.cmpi ne, %42, %c0_i32_19 : i32
    scf.if %43 {
      %c0_20 = arith.constant 0 : index
      %c0_21 = arith.constant 0 : index
      %44 = vector.load %arg7[%c0_20, %c0_21] : memref<1x256xf32, #tpu.memory_space<vmem>>, vector<1x256xf32>
      %45 = vector.shape_cast %44 : vector<1x256xf32> to vector<1x1x256xf32>
      %cst_22 = arith.constant dense<0.000000e+00> : vector<1xf32>
      %46 = vector.multi_reduction <add>, %45, %cst_22 [1, 2] : vector<1x1x256xf32> to vector<1xf32>
      %47 = vector.shape_cast %46 : vector<1xf32> to vector<1x1x1xf32>
      %48 = vector.extract %47[0, 0, 0] : f32 from vector<1x1x1xf32>
      %49 = vector.broadcast %48 : f32 to vector<1x1xf32>
      %c0_23 = arith.constant 0 : index
      %c0_24 = arith.constant 0 : index
      %c0_25 = arith.constant 0 : index
      %50 = vector.load %arg5[%c0_23, %c0_24, %c0_25] : memref<1x1x1xf32, #tpu.memory_space<vmem>>, vector<1x1x1xf32>
      %51 = vector.shape_cast %50 : vector<1x1x1xf32> to vector<1x1xf32>
      %52 = vector.shape_cast %49 : vector<1x1xf32> to vector<1x1x1xf32>
      tpu.vector_store %arg5[%c0_23, %c0_24, %c0_25], %52 {strides = array<i32>} : memref<1x1x1xf32, #tpu.memory_space<vmem>>, vector<1x1x1xf32>,
      %c0_26 = arith.constant 0 : index
      %c0_27 = arith.constant 0 : index
      %53 = vector.load %arg8[%c0_26, %c0_27] : memref<1x256xf32, #tpu.memory_space<vmem>>, vector<1x256xf32>
      %54 = vector.shape_cast %53 : vector<1x256xf32> to vector<1x1x256xf32>
      %cst_28 = arith.constant dense<0.000000e+00> : vector<1xf32>
      %55 = vector.multi_reduction <add>, %54, %cst_28 [1, 2] : vector<1x1x256xf32> to vector<1xf32>
      %56 = vector.shape_cast %55 : vector<1xf32> to vector<1x1x1xf32>
      %57 = vector.extract %56[0, 0, 0] : f32 from vector<1x1x1xf32>
      %58 = vector.broadcast %57 : f32 to vector<1x1xf32>
      %c0_29 = arith.constant 0 : index
      %c0_30 = arith.constant 0 : index
      %c0_31 = arith.constant 0 : index
      %59 = vector.load %arg6[%c0_29, %c0_30, %c0_31] : memref<1x1x1xf32, #tpu.memory_space<vmem>>, vector<1x1x1xf32>
      %60 = vector.shape_cast %59 : vector<1x1x1xf32> to vector<1x1xf32>
      %61 = vector.shape_cast %58 : vector<1x1xf32> to vector<1x1x1xf32>
      tpu.vector_store %arg6[%c0_29, %c0_30, %c0_31], %61 {strides = array<i32>} : memref<1x1x1xf32, #tpu.memory_space<vmem>>, vector<1x1x1xf32>,
    } else {
    }
    return
  }
  func.func @transform_0(%arg0: i32, %arg1: i32, %arg2: memref<1xi32, #tpu.memory_space<smem>>) -> (i32, i32, i32) {
    %c0_i32 = arith.constant 0 : i32
    %c0_i32_0 = arith.constant 0 : i32
    return %arg0, %c0_i32, %arg1 : i32, i32, i32
  }
  func.func @transform_1(%arg0: i32, %arg1: i32, %arg2: memref<1xi32, #tpu.memory_space<smem>>) -> (i32, i32, i32) {
    %c0_i32 = arith.constant 0 : i32
    %c0_i32_0 = arith.constant 0 : i32
    return %arg0, %c0_i32, %arg1 : i32, i32, i32
  }
  func.func @transform_2(%arg0: i32, %arg1: i32, %arg2: memref<1xi32, #tpu.memory_space<smem>>) -> (i32, i32, i32) {
    %c0_i32 = arith.constant 0 : i32
    %c0_i32_0 = arith.constant 0 : i32
    %c0_i32_1 = arith.constant 0 : i32
    return %arg0, %c0_i32, %c0_i32_0 : i32, i32, i32
  }
  func.func @transform_3(%arg0: i32, %arg1: i32, %arg2: memref<1xi32, #tpu.memory_space<smem>>) -> (i32, i32, i32) {
    %c0_i32 = arith.constant 0 : i32
    %c0_i32_0 = arith.constant 0 : i32
    %c0_i32_1 = arith.constant 0 : i32
    return %arg0, %c0_i32, %c0_i32_0 : i32, i32, i32
  }
}

</mosaic_0001>

<llo_original>
// kernel: tpu_custom_call.1
$region0: #{tpu_custom_call.1}
  #allocation0 [shape = 'u32[]', space=smem, size = 0x4, offset = 0x4, fixed_abs, tag = 'smem constant byte address 0x4 - core index']
  #allocation1 [shape = 'u32[72,128]{1,0:T(1,128)}', space=vmem, size = 0x9000, scoped, tag = 'internal scratch']
  #allocation2 [shape = 'f32[1,256]{1,0:T(1,128)}', space=vmem, size = 0x400, scoped, tag = 'scratch operand']
  #allocation3 [shape = 'f32[1,256]{1,0:T(1,128)}', space=vmem, size = 0x400, scoped, tag = 'scratch operand']
  #allocation4 [shape = 's32[1]{0}', space=sflag, size = 0x4, scoped, tag = 'scoped memory for tpu_custom_call.1']
  #allocation5 [shape = 's32[1]{0:T(128)S(6)}', space=smem, size = 0x200, scoped, tag = 'prefetched SMEM operand 0']
  %s0 = inlined_call_operand.<no memory space> [shape: s32[1], index: 0, kind: input, shape index: {}]
  %s1 = inlined_call_operand.hbm [shape: f32[2,4,256], index: 1, kind: input, shape index: {}]
  %s2 = inlined_call_operand.hbm [shape: s32[2,1,256], index: 2, kind: input, shape index: {}]
  %s3 = inlined_call_operand.vmem [shape: f32[2,1,1], index: 3, kind: output, shape index: {0}]
  %s4 = inlined_call_operand.vmem [shape: f32[2,1,1], index: 4, kind: output, shape index: {1}]
  %5 = xla_tuple %s3, %s4
  %s6 = sld [smem:[#allocation0]]
  $region73: #{tpu_custom_call.1} parent=0
    _
  %s8 = ssub.s32 1, %s6
  %s9 = scalar_select 0, %s8, %s6
  %10 = sst [smem:[#allocation5]] %s0
  $region1: #{tpu_custom_call.1} parent=0
    #allocation6 [shape = 'u8[8192]{0}', space=vmem, size = 0x2000, scoped, tag = 'input window, operand 1']
    #allocation7 [shape = 's32[2]{0}', space=sflag, size = 0x8, scoped, tag = 'scoped memory for tpu_custom_call.1']
    #allocation8 [shape = 'u8[2048]{0}', space=vmem, size = 0x800, scoped, tag = 'input window, operand 2']
    #allocation9 [shape = 's32[2]{0}', space=sflag, size = 0x8, scoped, tag = 'scoped memory for tpu_custom_call.1']
    %11 = vsyncpa [#allocation7], 0
    %s12 = scalar_lea.sflag [#allocation7], 1
    %13 = vsyncpa %s12, 0
    %14 = vsyncpa [#allocation9], 0
    %s15 = scalar_lea.sflag [#allocation9], 1
    %16 = vsyncpa %s15, 0
    loop: start=0, step=1, limit=4
    $region2: #{tpu_custom_call.1} parent=1 // loop_pre_header
      _
    $region3: #{tpu_custom_call.1} parent=1 // loop_header
      %s18 = sphi 0, %s22
      %p19 = scmp.ge.s32.totalorder %s18, 4
      %s25 = sphi 0, %s37
      %s26 = sphi 0, %s33
      %s27 = sphi 0, %s25
      %s28 = sphi 0, %s26
      %s29 = sphi 0, %s27
      %s30 = sphi 0, %s28
      %s42 = sphi 0, %s44
      %s45 = sphi 0, %s42
      %s46 = sphi 0, %s45
      %s62 = sphi 0, %s46
      %s70 = sphi 0, %s72
      %s73 = sphi 0, %s70
      %s74 = sphi 0, %s73
      %s90 = sphi 0, %s74
      %s96 = sphi 0, %s98
      %s99 = sphi 0, %s96
      %s100 = sphi 0, %s99
      %s116 = sphi 0, %s100
      %s122 = sphi 0, %s124
      %s125 = sphi 0, %s122
      %s126 = sphi 0, %s125
      %s142 = sphi 0, %s126
    $region4: #{tpu_custom_call.1} parent=1 // loop_header_branch
      %21 = sbr.rel (%p19) target = $region8
    $region5: #{tpu_custom_call.1} parent=1 // loop_body
      %s23 = ssub.s32 %s18, 1
      %s24 = ssub.s32 %s18, 2
      %s31 = sadd.s32 1, %s26
      %p32 = scmp.ge.s32.totalorder %s31, 1
      %s33 = scalar_select %p32, 0, %s31
      %s34 = sadd.s32 1, %s25
      %s35 = scalar_select %p32, %s34, %s25
      %p36 = scmp.ge.s32.totalorder %s35, 2
      %s37 = scalar_select %p36, 0, %s35
      %s38 = ssub.s32 %s25, %s37
      %s39 = ssub.s32 %s26, %s33
      %s40 = sor.u32 %s38, %s39
      %p41 = scmp.eq.s32.totalorder %s40, 0
      %s43 = sadd.s32 %s42, 1
      %s44 = scalar_select %p41, %s42, %s43
      %p47 = pneg %p41
      %p48 = scmp.eq.s32.totalorder %s18, 1
      %p49 = por %p47, %p48
      %p50 = scmp.ne.s32.totalorder %s42, %s45
      %p51 = scmp.eq.s32.totalorder %s18, 0
      %p52 = por %p50, %p51
      %p53 = scmp.ne.s32.totalorder %s42, %s45
      %p54 = scmp.eq.s32.totalorder %s23, 1
      %p55 = por %p53, %p54
      %p56 = scmp.ne.s32.totalorder %s45, %s46
      %p57 = scmp.eq.s32.totalorder %s23, 0
      %p58 = por %p56, %p57
      %p59 = scmp.ne.s32.totalorder %s45, %s46
      %p60 = scmp.eq.s32.totalorder %s24, 1
      %p61 = por %p59, %p60
      %p63 = scmp.ne.s32.totalorder %s46, %s62
      %p64 = scmp.eq.s32.totalorder %s24, 0
      %p65 = por %p63, %p64
      %s66 = ssub.s32 %s25, %s37
      %s67 = ssub.s32 %s26, %s33
      %s68 = sor.u32 %s66, %s67
      %p69 = scmp.eq.s32.totalorder %s68, 0
      %s71 = sadd.s32 %s70, 1
      %s72 = scalar_select %p69, %s70, %s71
      %p75 = pneg %p69
      %p76 = scmp.eq.s32.totalorder %s18, 1
      %p77 = por %p75, %p76
      %p78 = scmp.ne.s32.totalorder %s70, %s73
      %p79 = scmp.eq.s32.totalorder %s18, 0
      %p80 = por %p78, %p79
      %p81 = scmp.ne.s32.totalorder %s70, %s73
      %p82 = scmp.eq.s32.totalorder %s23, 1
      %p83 = por %p81, %p82
      %p84 = scmp.ne.s32.totalorder %s73, %s74
      %p85 = scmp.eq.s32.totalorder %s23, 0
      %p86 = por %p84, %p85
      %p87 = scmp.ne.s32.totalorder %s73, %s74
      %p88 = scmp.eq.s32.totalorder %s24, 1
      %p89 = por %p87, %p88
      %p91 = scmp.ne.s32.totalorder %s74, %s90
      %p92 = scmp.eq.s32.totalorder %s24, 0
      %p93 = por %p91, %p92
      %s94 = ssub.s32 %s25, %s37
      %p95 = scmp.eq.s32.totalorder %s94, 0
      %s97 = sadd.s32 %s96, 1
      %s98 = scalar_select %p95, %s96, %s97
      %p101 = pneg %p95
      %p102 = scmp.eq.s32.totalorder %s18, 1
      %p103 = por %p101, %p102
      %p104 = scmp.ne.s32.totalorder %s96, %s99
      %p105 = scmp.eq.s32.totalorder %s18, 0
      %p106 = por %p104, %p105
      %p107 = scmp.ne.s32.totalorder %s96, %s99
      %p108 = scmp.eq.s32.totalorder %s23, 1
      %p109 = por %p107, %p108
      %p110 = scmp.ne.s32.totalorder %s99, %s100
      %p111 = scmp.eq.s32.totalorder %s23, 0
      %p112 = por %p110, %p111
      %p113 = scmp.ne.s32.totalorder %s99, %s100
      %p114 = scmp.eq.s32.totalorder %s24, 1
      %p115 = por %p113, %p114
      %p117 = scmp.ne.s32.totalorder %s100, %s116
      %p118 = scmp.eq.s32.totalorder %s24, 0
      %p119 = por %p117, %p118
      %s120 = ssub.s32 %s25, %s37
      %p121 = scmp.eq.s32.totalorder %s120, 0
      %s123 = sadd.s32 %s122, 1
      %s124 = scalar_select %p121, %s122, %s123
      %p127 = pneg %p121
      %p128 = scmp.eq.s32.totalorder %s18, 1
      %p129 = por %p127, %p128
      %p130 = scmp.ne.s32.totalorder %s122, %s125
      %p131 = scmp.eq.s32.totalorder %s18, 0
      %p132 = por %p130, %p131
      %p133 = scmp.ne.s32.totalorder %s122, %s125
      %p134 = scmp.eq.s32.totalorder %s23, 1
      %p135 = por %p133, %p134
      %p136 = scmp.ne.s32.totalorder %s125, %s126
      %p137 = scmp.eq.s32.totalorder %s23, 0
      %p138 = por %p136, %p137
      %p139 = scmp.ne.s32.totalorder %s125, %s126
      %p140 = scmp.eq.s32.totalorder %s24, 1
      %p141 = por %p139, %p140
      %p143 = scmp.ne.s32.totalorder %s126, %s142
      %p144 = scmp.eq.s32.totalorder %s24, 0
      %p145 = por %p143, %p144
      %p146 = scmp.le.s32.totalorder 1, %s18
      %p147 = scmp.lt.s32.totalorder %s18, 3
      %p148 = pnand %p146, %p147
      %p149 = pneg %p148
      // Predicated region
      $region9: #{tpu_custom_call.1} parent=5 // pred_check
        _
      $region10: #{tpu_custom_call.1} parent=5 // pred_check_branch
        %151 = sbr.rel (%p148) target = $region12
      $region11: #{tpu_custom_call.1} parent=5 // pred_region
        %s152 = ssub.s32 %s18, 1
      $region12: #{tpu_custom_call.1} parent=5 // pred_fallthru
        _
      %p153 = scmp.lt.s32.totalorder %s18, 2
      // Predicated region
      $region13: #{tpu_custom_call.1} parent=5 // pred_check
        %p154 = pneg %p153
      $region14: #{tpu_custom_call.1} parent=5 // pred_check_branch
        %156 = sbr.rel (%p154) target = $region16
      $region15: #{tpu_custom_call.1} parent=5 // pred_region
        // Predicated region
        $region17: #{tpu_custom_call.1} parent=15 // pred_check
          %p157 = pneg %p52
        $region18: #{tpu_custom_call.1} parent=15 // pred_check_branch
          %159 = sbr.rel (%p157) target = $region20
        $region19: #{tpu_custom_call.1} parent=15 // pred_region
          %s160 = sand.u32 %s42, 1
          %s161 = scalar_lea.sflag [#allocation7], %s160
          %s162 = sand.u32 %s42, 1
          %s163 = smul.addr %s162, 8
          %s164 = scalar_lea.vmem [#allocation6], %s163
          %s165 = smul.u32 2, %s26
          %167 = vsyncadd %s161, 0
          %s168 = smul.addr %s25, 2
          %s169 = sadd.s32 %s165, %s168
          %s170 = smul.addr %s169, 4
          %s171 = scalar_lea.hbm %s1, %s170
          %s173 = sshll.u32 %s171, 4
          %s174 = int_to_ptr.hbm [resolvable:$true] %s173
          %s175 = sshll.u32 %s164, 4
          %s176 = int_to_ptr.vmem [resolvable:$true] %s175
          %178 = dma.hbm_to_vmem [thread:$0]  %s174, 128, %s176, %s161
        $region20: #{tpu_custom_call.1} parent=15 // pred_fallthru
          _
        // Predicated region
        $region21: #{tpu_custom_call.1} parent=15 // pred_check
          %p179 = pneg %p80
        $region22: #{tpu_custom_call.1} parent=15 // pred_check_branch
          %181 = sbr.rel (%p179) target = $region24
        $region23: #{tpu_custom_call.1} parent=15 // pred_region
          %s182 = sand.u32 %s70, 1
          %s183 = scalar_lea.sflag [#allocation9], %s182
          %s184 = sand.u32 %s70, 1
          %s185 = smul.addr %s184, 2
          %s186 = scalar_lea.vmem [#allocation8], %s185
          %s187 = smul.u32 2, %s26
          %189 = vsyncadd %s183, 0
          %s190 = smul.addr %s25, 2
          %s191 = sadd.s32 %s187, %s190
          %s192 = scalar_lea.hbm %s2, %s191
          %s194 = sshll.u32 %s192, 4
          %s195 = int_to_ptr.hbm [resolvable:$true] %s194
          %s196 = sshll.u32 %s186, 4
          %s197 = int_to_ptr.vmem [resolvable:$true] %s196
          %199 = dma.hbm_to_vmem [thread:$0]  %s195, 32, %s197, %s183
        $region24: #{tpu_custom_call.1} parent=15 // pred_fallthru
          _
      $region16: #{tpu_custom_call.1} parent=5 // pred_fallthru
        _
      %p200 = scmp.le.s32.totalorder 1, %s18
      %p201 = scmp.lt.s32.totalorder %s18, 3
      %p202 = pnand %p200, %p201
      %p203 = pneg %p202
      // Predicated region
      $region25: #{tpu_custom_call.1} parent=5 // pred_check
        _
      $region26: #{tpu_custom_call.1} parent=5 // pred_check_branch
        %205 = sbr.rel (%p202) target = $region28
      $region27: #{tpu_custom_call.1} parent=5 // pred_region
        %s206 = ssub.s32 %s18, 1
        %s207 = sand.u32 %s45, 1
        %s208 = scalar_lea.sflag [#allocation7], %s207
        %s209 = sand.u32 %s45, 1
        %s210 = smul.addr %s209, 8
        %s211 = scalar_lea.vmem [#allocation6], %s210
        // Predicated region
        $region29: #{tpu_custom_call.1} parent=27 // pred_check
          %p212 = pneg %p58
        $region30: #{tpu_custom_call.1} parent=27 // pred_check_branch
          %214 = sbr.rel (%p212) target = $region32
        $region31: #{tpu_custom_call.1} parent=27 // pred_region
          %216 = dma.done %s208, 128
        $region32: #{tpu_custom_call.1} parent=27 // pred_fallthru
          _
        %s217 = sand.u32 %s73, 1
        %s218 = scalar_lea.sflag [#allocation9], %s217
        %s219 = sand.u32 %s73, 1
        %s220 = smul.addr %s219, 2
        %s221 = scalar_lea.vmem [#allocation8], %s220
        // Predicated region
        $region33: #{tpu_custom_call.1} parent=27 // pred_check
          %p222 = pneg %p86
        $region34: #{tpu_custom_call.1} parent=27 // pred_check_branch
          %224 = sbr.rel (%p222) target = $region36
        $region35: #{tpu_custom_call.1} parent=27 // pred_region
          %226 = dma.done %s218, 32
        $region36: #{tpu_custom_call.1} parent=27 // pred_fallthru
          _
        %s227 = sand.u32 %s45, 1
        %s228 = scalar_lea.sflag [#allocation7], %s227
        %s229 = sand.u32 %s45, 1
        %s230 = smul.addr %s229, 8
        %s231 = scalar_lea.vmem [#allocation6], %s230
        %p232 = pneg %p58
        %p233 = pneg %p55
        %s234 = sand.u32 %s73, 1
        %s235 = scalar_lea.sflag [#allocation9], %s234
        %s236 = sand.u32 %s73, 1
        %s237 = smul.addr %s236, 2
        %s238 = scalar_lea.vmem [#allocation8], %s237
        %p239 = pneg %p86
        %p240 = pneg %p83
        %p241 = pneg %p112
        %p242 = pneg %p109
        %p243 = scmp.lt.s32.totalorder %s27, 1
        %s244 = scalar_select %p243, %s27, 1
        %s245 = scalar_lea.vmem %s3, %s244
        %p246 = pneg %p138
        %p247 = pneg %p135
        %p248 = scmp.lt.s32.totalorder %s27, 1
        %s249 = scalar_select %p248, %s27, 1
        %s250 = scalar_lea.vmem %s4, %s249
        %s251 = smul.u32 2, %s28
        %s252 = smul.u32 2, %s28
        %p253 = scmp.lt.s32.totalorder %s27, 1
        %s254 = scalar_select %p253, %s27, 1
        %s255 = scalar_lea.vmem %s3, %s254
        %p256 = scmp.lt.s32.totalorder %s27, 1
        %s257 = scalar_select %p256, %s27, 1
        %s258 = scalar_lea.vmem %s4, %s257
        %p259 = scmp.eq.s32.totalorder %s28, 0
        // Predicated region
        $region37: #{tpu_custom_call.1} parent=27 // pred_check
          %p260 = pneg %p259
        $region38: #{tpu_custom_call.1} parent=27 // pred_check_branch
          %262 = sbr.rel (%p260) target = $region40
        $region39: #{tpu_custom_call.1} parent=27 // pred_region
          %v263 = vlaneseq
          %vm264 = vcmp.ge.s32.totalorder %v263, 0
          %vm265 = vcmp.lt.s32.totalorder %v263, 256
          %vm266 = vmand %vm264, %vm265
          %267 = vst.msk [vmem:[#allocation2] sm:$0x3] %vm266, 0.0
          %268 = vst.msk [vmem:[#allocation3] sm:$0x3] %vm266, 0.0
        $region40: #{tpu_custom_call.1} parent=27 // pred_fallthru
          _
        %v269 = vld [vmem:[%s211] sm:$0xff]
        %v270 = vld [vmem:[%s221] sm:$0x3]
        %vm271 = vcmp.ne.s32.totalorder %v270, 4294967196
        %273 = vst [vmem:[#allocation1] ss:$2 sm:$0xff] %v269
        %v274 = vld.sshfl [vmem:[#allocation1] sm:$0xff pattern:$0x75316420]
        %v275 = vld.sshfl [vmem:[#allocation1 + $0x8] sm:$0xff pattern:$0x75316420]
        %vm278 = vcmask 1043456
        %v279 = vsel %vm278, %v274, -inf
        %v280 = vrot.slane %v279, 4
        %v281 = vmax.f32 %v279, %v280
        %v282 = vrot.slane %v281, 2
        %v283 = vmax.f32 %v281, %v282
        %v284 = vrot.slane %v283, 1
        %v285 = vmax.f32 %v283, %v284
        %v286 = vsel %vm278, %v275, -inf
        %v287 = vrot.slane %v286, 4
        %v288 = vmax.f32 %v286, %v287
        %v289 = vrot.slane %v288, 2
        %v290 = vmax.f32 %v288, %v289
        %v291 = vrot.slane %v290, 1
        %v292 = vmax.f32 %v290, %v291
        %v295 = vrot.slane %v292, 4
        %v296 = vsel %vm278, %v285, %v295
        %v298 = vsub.f32 %v269, %v296
        %v299 = vmul.f32 %v298, 1.442695
        %v300 = vpow.pop %v299
        %302 = vst [vmem:[#allocation1] ss:$2 sm:$0xff] %v300
        %v303 = vld.sshfl [vmem:[#allocation1] sm:$0xff pattern:$0x75316420]
        %v304 = vld.sshfl [vmem:[#allocation1 + $0x8] sm:$0xff pattern:$0x75316420]
        %v307 = vsel %vm278, %v303, 0.0
        %v308 = vrot.slane %v307, 4
        %v309 = vadd.f32 %v307, %v308
        %v310 = vrot.slane %v309, 2
        %v311 = vadd.f32 %v309, %v310
        %v312 = vrot.slane %v311, 1
        %v313 = vadd.f32 %v311, %v312
        %v314 = vsel %vm278, %v304, 0.0
        %v315 = vrot.slane %v314, 4
        %v316 = vadd.f32 %v314, %v315
        %v317 = vrot.slane %v316, 2
        %v318 = vadd.f32 %v316, %v317
        %v319 = vrot.slane %v318, 1
        %v320 = vadd.f32 %v318, %v319
        %v321 = vlog2.pop %v313
        %v322 = vmul.f32 %v321, 0.6931472
        %v323 = vlog2.pop %v320
        %v324 = vmul.f32 %v323, 0.6931472
        %v325 = vadd.f32 %v285, %v322
        %v326 = vadd.f32 %v292, %v324
        %v327 = vsel %vm271, %v270, 0
        %v328 = vlaneseq
        %v329 = vshrl.u32 %v328, 7
        %v330 = vperm.slane %v327, 0
        %v331 = vperm.slane %v327, 1
        %vm332 = vcmp.eq.s32.totalorder %v329, %v330
        %vm333 = vcmp.eq.s32.totalorder %v329, %v331
        %334 = vst [vmem:[#allocation1] ss:$2 sm:$0xff] %v269
        %v335 = vld.sshfl [vmem:[#allocation1] sm:$0xff pattern:$0x75316420]
        %v336 = vld.sshfl [vmem:[#allocation1 + $0x8] sm:$0xff pattern:$0x75316420]
        %v339 = vsel %vm332, %v335, 0.0
        %v340 = vsel %vm333, %v336, 0.0
        %v341 = vsel %vm278, %v339, 0.0
        %v342 = vrot.slane %v341, 4
        %v343 = vadd.f32 %v341, %v342
        %v344 = vrot.slane %v343, 2
        %v345 = vadd.f32 %v343, %v344
        %v346 = vrot.slane %v345, 1
        %v347 = vadd.f32 %v345, %v346
        %v348 = vsel %vm278, %v340, 0.0
        %v349 = vrot.slane %v348, 4
        %v350 = vadd.f32 %v348, %v349
        %v351 = vrot.slane %v350, 2
        %v352 = vadd.f32 %v350, %v351
        %v353 = vrot.slane %v352, 1
        %v354 = vadd.f32 %v352, %v353
        %v355 = vsub.f32 %v325, %v347
        %v356 = vsub.f32 %v326, %v354
        %s357 = sld [smem:[#allocation5]]
        %p358 = scmp.lt.s32.totalorder %s27, %s357
        // Predicated region
        $region41: #{tpu_custom_call.1} parent=27 // pred_check
          %p359 = pneg %p358
        $region42: #{tpu_custom_call.1} parent=27 // pred_check_branch
          %361 = sbr.rel (%p359) target = $region44
        $region43: #{tpu_custom_call.1} parent=27 // pred_region
          %v362 = vmul.f32 %v355, -2.0
          %v363 = vmul.f32 %v356, -2.0
          %v364 = vmul.f32 %v362, 1.442695
          %v365 = vpow.pop %v364
          %v366 = vmul.f32 %v363, 1.442695
          %v367 = vpow.pop %v366
          %v368 = vld [vmem:[#allocation2] sm:$0x3]
          %v369 = vmul.f32 %v355, %v365
          %v370 = vmul.f32 %v356, %v367
          %v373 = vrot.slane %v370, 7
          %vm374 = vcmask 1040384
          %v375 = vsel %vm374, %v369, %v373
          %v377 = vsel %vm271, %v375, 0.0
          %v378 = vadd.f32 %v368, %v377
          %v379 = vlaneseq
          %vm380 = vcmp.ge.s32.totalorder %v379, 0
          %vm381 = vcmp.lt.s32.totalorder %v379, 256
          %vm382 = vmand %vm380, %vm381
          %383 = vst.msk [vmem:[#allocation2] sm:$0x3] %vm382, %v378
        $region44: #{tpu_custom_call.1} parent=27 // pred_fallthru
          _
        %s384 = sld [smem:[#allocation5]]
        %p385 = scmp.ge.s32.totalorder %s27, %s384
        // Predicated region
        $region45: #{tpu_custom_call.1} parent=27 // pred_check
          %p386 = pneg %p385
        $region46: #{tpu_custom_call.1} parent=27 // pred_check_branch
          %388 = sbr.rel (%p386) target = $region48
        $region47: #{tpu_custom_call.1} parent=27 // pred_region
          %v389 = vld [vmem:[#allocation2] sm:$0x3]
          %v392 = vrot.slane %v356, 7
          %vm393 = vcmask 1040384
          %v394 = vsel %vm393, %v355, %v392
          %v396 = vsel %vm271, %v394, 0.0
          %v397 = vadd.f32 %v389, %v396
          %v398 = vlaneseq
          %vm399 = vcmp.ge.s32.totalorder %v398, 0
          %vm400 = vcmp.lt.s32.totalorder %v398, 256
          %vm401 = vmand %vm399, %vm400
          %402 = vst.msk [vmem:[#allocation2] sm:$0x3] %vm401, %v397
        $region48: #{tpu_custom_call.1} parent=27 // pred_fallthru
          _
        %v403 = vld [vmem:[#allocation3] sm:$0x3]
        %v404 = vsel %vm271, 1, 0
        %v405 = vcvt.s32.f32 %v404
        %v406 = vadd.f32 %v403, %v405
        %v407 = vlaneseq
        %vm408 = vcmp.ge.s32.totalorder %v407, 0
        %vm409 = vcmp.lt.s32.totalorder %v407, 256
        %vm410 = vmand %vm408, %vm409
        %411 = vst.msk [vmem:[#allocation3] sm:$0x3] %vm410, %v406
        // Predicated region
        $region49: #{tpu_custom_call.1} parent=27 // pred_check
          %p412 = pneg %p259
        $region50: #{tpu_custom_call.1} parent=27 // pred_check_branch
          %414 = sbr.rel (%p412) target = $region52
        $region51: #{tpu_custom_call.1} parent=27 // pred_region
          %v415 = vld [vmem:[#allocation2] sm:$0x3]
          %v417 = vperm.slane %v415, 0
          %v418 = vperm.slane %v415, 1
          %vm421 = vcmask 1040384
          %v422 = vsel %vm421, %v417, 0.0
          %v423 = vsel %vm421, %v418, 0.0
          %v424 = vadd.f32 %v422, %v423
          %425 = vadd.xlane.f32.xlu0 %v424
          %v426 = vpop.xlane.xlu0 %425
          %v427 = vrot.slane %v426, 4
          %v428 = vadd.f32 %v426, %v427
          %v429 = vrot.slane %v428, 2
          %v430 = vadd.f32 %v428, %v429
          %v431 = vrot.slane %v430, 1
          %v432 = vadd.f32 %v430, %v431
          %s433 = vtos %v432
          %v434 = vstv %s433
          %vm435 = vcmask 0
          %436 = vst.msk [vmem:[%s255] sm:$0x1] %vm435, %v434
          %v437 = vld [vmem:[#allocation3] sm:$0x3]
          %v439 = vperm.slane %v437, 0
          %v440 = vperm.slane %v437, 1
          %v443 = vsel %vm421, %v439, 0.0
          %v444 = vsel %vm421, %v440, 0.0
          %v445 = vadd.f32 %v443, %v444
          %446 = vadd.xlane.f32.xlu0 %v445
          %v447 = vpop.xlane.xlu0 %446
          %v448 = vrot.slane %v447, 4
          %v449 = vadd.f32 %v447, %v448
          %v450 = vrot.slane %v449, 2
          %v451 = vadd.f32 %v449, %v450
          %v452 = vrot.slane %v451, 1
          %v453 = vadd.f32 %v451, %v452
          %s454 = vtos %v453
          %v455 = vstv %s454
          %456 = vst.msk [vmem:[%s258] sm:$0x1] %vm435, %v455
        $region52: #{tpu_custom_call.1} parent=27 // pred_fallthru
          _
        %p457 = scmp.lt.s32.totalorder %s27, 1
        %s458 = scalar_select %p457, %s27, 1
        %s459 = scalar_lea.vmem %s3, %s458
        %p460 = scmp.lt.s32.totalorder %s27, 1
        %s461 = scalar_select %p460, %s27, 1
        %s462 = scalar_lea.vmem %s4, %s461
        // Predicated region
        $region53: #{tpu_custom_call.1} parent=27 // pred_check
          %p463 = pneg %p109
        $region54: #{tpu_custom_call.1} parent=27 // pred_check_branch
          %465 = sbr.rel (%p463) target = $region56
        $region55: #{tpu_custom_call.1} parent=27 // pred_region
          _
        $region56: #{tpu_custom_call.1} parent=27 // pred_fallthru
          _
        // Predicated region
        $region57: #{tpu_custom_call.1} parent=27 // pred_check
          %p466 = pneg %p135
        $region58: #{tpu_custom_call.1} parent=27 // pred_check_branch
          %468 = sbr.rel (%p466) target = $region60
        $region59: #{tpu_custom_call.1} parent=27 // pred_region
          _
        $region60: #{tpu_custom_call.1} parent=27 // pred_fallthru
          _
      $region28: #{tpu_custom_call.1} parent=5 // pred_fallthru
        _
      %p469 = scmp.le.s32.totalorder 2, %s18
      // Predicated region
      $region61: #{tpu_custom_call.1} parent=5 // pred_check
        %p470 = pneg %p469
      $region62: #{tpu_custom_call.1} parent=5 // pred_check_branch
        %472 = sbr.rel (%p470) target = $region64
      $region63: #{tpu_custom_call.1} parent=5 // pred_region
        %s473 = ssub.s32 %s18, 2
        // Predicated region
        $region65: #{tpu_custom_call.1} parent=63 // pred_check
          %p474 = pneg %p115
        $region66: #{tpu_custom_call.1} parent=63 // pred_check_branch
          %476 = sbr.rel (%p474) target = $region68
        $region67: #{tpu_custom_call.1} parent=63 // pred_region
          %p477 = scmp.lt.s32.totalorder %s29, 1
          %s478 = scalar_select %p477, %s29, 1
          %s479 = scalar_lea.vmem %s3, %s478
        $region68: #{tpu_custom_call.1} parent=63 // pred_fallthru
          _
        // Predicated region
        $region69: #{tpu_custom_call.1} parent=63 // pred_check
          %p480 = pneg %p141
        $region70: #{tpu_custom_call.1} parent=63 // pred_check_branch
          %482 = sbr.rel (%p480) target = $region72
        $region71: #{tpu_custom_call.1} parent=63 // pred_region
          %p483 = scmp.lt.s32.totalorder %s29, 1
          %s484 = scalar_select %p483, %s29, 1
          %s485 = scalar_lea.vmem %s4, %s484
        $region72: #{tpu_custom_call.1} parent=63 // pred_fallthru
          _
      $region64: #{tpu_custom_call.1} parent=5 // pred_fallthru
        _
    $region6: #{tpu_custom_call.1} parent=1 // loop_footer
      %s22 = sadd.s32 1, %s18
    $region7: #{tpu_custom_call.1} parent=1 // loop_footer_branch
      %17 = sbr.rel target = $region3
    $region8: #{tpu_custom_call.1} parent=1 // loop_exit
      _
    %486 = vsyncpa [#allocation7], 1
    %s487 = scalar_lea.sflag [#allocation7], 1
    %488 = vsyncpa %s487, 1
    %489 = vsyncpa [#allocation9], 1
    %s490 = scalar_lea.sflag [#allocation9], 1
    %491 = vsyncpa %s490, 1

</llo_original>
